<compile_context>
chip_gen: v7x
topology: tpu7x:2x2x1
jax: 0.10.0
libtpu: 0.0.40
codegen_flags: <defaults>
</compile_context>

<pallas_src>
import functools

import jax
import jax.numpy as jnp
from jax.experimental import pallas as pl
from jax.experimental.pallas import tpu as pltpu

# ----------------------------- config (small test sizes) -----------------------------
BATCH = 4           # folded 2-per-step -> grid=(2,) "parallel" (keeps both v7x TCs busy)
IN_CHANNEL = 32     # ResBlock in_channel
RES_CHANNEL = 16    # ResBlock channel (hidden width)
HW = 16             # spatial H = W

PAD = 128           # lane-aligned flat-spatial padding (must be >= W + 1)

# bf16 MXU inputs (full-rate MXU on v6e/v7x, native path on v5e); accumulation and the
# epilogue (bias, ReLU, residual) stay f32.  Set to jnp.float32 for near-exact parity.
MXU_INPUT_DTYPE = jnp.bfloat16


# ----------------------------- Pallas kernel -----------------------------
def _resblock_kernel(x_ref, w3_ref, b3_ref, w1_ref, b1_ref, o_ref, *,
                     W, n_pix, pad, segs, mxu_dtype):
    """Fused ResBlock for `segs` batch elements (channels-first, flat spatial on lanes).

    x_ref  : (segs, C_in, n_pix + 2*pad)  f32, per-segment zero-padded flat spatial
    w3_ref : (C_mid, 9*C_in)              mxu_dtype, column index = (kh*3 + kw)*C_in + c
    b3_ref : (C_mid, 1)                   f32
    w1_ref : (C_in, C_mid)                mxu_dtype
    b1_ref : (C_in, 1)                    f32
    o_ref  : (segs, C_in, n_pix)          f32
    """
    seg_len = n_pix + 2 * pad

    # Column-within-image-row of every source lane (pad lanes hold zeros, value irrelevant).
    # Exactly two wrap masks, computed once (hoisted out of the tap loop):
    #   dw = -1 taps never legally read column W-1 (such reads are row wraps),
    #   dw = +1 taps never legally read column 0.
    lane = jax.lax.broadcasted_iota(jnp.int32, (1, seg_len), 1)
    col = (lane - pad) % W
    ok_left = col != (W - 1)      # valid source lanes for dw == -1 taps
    ok_right = col != 0           # valid source lanes for dw == +1 taps

    # Per-segment sources: ReLU once, cast to MXU dtype once, mask once (2 selects total).
    src = []                      # src[s][dw] -> (C_in, seg_len) in mxu_dtype
    for s in range(segs):
        r = jnp.maximum(x_ref[s], 0.0).astype(mxu_dtype)
        src.append({-1: jnp.where(ok_left, r, 0),
                    0: r,
                    1: jnp.where(ok_right, r, 0)})

    # Stack the 9 shifted windows on the sublane axis (row = (kh*3+kw)*C_in + c) and the
    # `segs` batch elements on the lane axis -> a single (9*C_in, segs*n_pix) MXU operand.
    rows = []
    for dh in (-1, 0, 1):
        for dw in (-1, 0, 1):
            d = dh * W + dw
            wins = [src[s][dw][:, pad + d: pad + d + n_pix] for s in range(segs)]
            rows.append(wins[0] if segs == 1 else jnp.concatenate(wins, axis=1))
    stacked = jnp.concatenate(rows, axis=0)

    # Conv3x3 as ONE K = 9*C_in matmul (f32 accumulation), then bias + ReLU (f32, on-chip).
    h = jnp.dot(w3_ref[...], stacked, preferred_element_type=jnp.float32)
    h = jnp.maximum(h + b3_ref[...], 0.0)

    # Conv1x1 (K = C_mid) + bias, then residual add and store per segment (all f32).
    y = jnp.dot(w1_ref[...], h.astype(mxu_dtype),
                preferred_element_type=jnp.float32) + b1_ref[...]
    for s in range(segs):
        res = x_ref[s][:, pad: pad + n_pix]                       # raw (pre-ReLU) residual
        o_ref[s] = (y[:, s * n_pix:(s + 1) * n_pix] + res).astype(o_ref.dtype)


# ----------------------------- wrapper -----------------------------
def resblock_forward(params, x_nchw, *, segs_per_step=None, mxu_dtype=MXU_INPUT_DTYPE):
    """ResBlock forward: x (N, C, H, W) f32 -> (N, C, H, W) f32."""
    w3, b3, w1, b1 = params["w3"], params["b3"], params["w1"], params["b1"]
    N, C, H, W = x_nchw.shape
    c_mid = w3.shape[0]
    n_pix = H * W
    pad = PAD
    assert pad >= W + 1, "pad must cover all 3x3 tap shifts (|dh*W + dw| <= W + 1)"

    if segs_per_step is None:
        # Fold batch onto the lane axis, but keep >= 2 grid steps when possible so v7x's
        # second TensorCore has work ("parallel" is a measured no-op on v5e/v6e).
        segs_per_step = max(1, N // 2)
    while N % segs_per_step:
        segs_per_step -= 1
    segs = segs_per_step
    seg_len = n_pix + 2 * pad

    # Free reshape to (N, C, H*W) + lane-aligned zero pad on the flat spatial axis.
    x_pad = jnp.pad(x_nchw.reshape(N, C, n_pix), ((0, 0), (0, 0), (pad, pad)))

    # Kernel-layout weights (tap-major 3x3, pre-cast to the MXU dtype), f32 biases.
    w3_k = jnp.transpose(w3, (0, 2, 3, 1)).reshape(c_mid, 9 * C).astype(mxu_dtype)
    w1_k = w1.reshape(C, c_mid).astype(mxu_dtype)
    b3_k = b3.reshape(c_mid, 1).astype(jnp.float32)
    b1_k = b1.reshape(C, 1).astype(jnp.float32)

    kernel = functools.partial(_resblock_kernel, W=W, n_pix=n_pix, pad=pad,
                               segs=segs, mxu_dtype=mxu_dtype)
    out = pl.pallas_call(
        kernel,
        out_shape=jax.ShapeDtypeStruct((N, C, n_pix), jnp.float32),
        grid=(N // segs,),
        in_specs=[
            pl.BlockSpec((segs, C, seg_len), lambda g: (g, 0, 0)),
            pl.BlockSpec((c_mid, 9 * C), lambda g: (0, 0)),
            pl.BlockSpec((c_mid, 1), lambda g: (0, 0)),
            pl.BlockSpec((C, c_mid), lambda g: (0, 0)),
            pl.BlockSpec((C, 1), lambda g: (0, 0)),
        ],
        out_specs=pl.BlockSpec((segs, C, n_pix), lambda g: (g, 0, 0)),
        compiler_params=pltpu.CompilerParams(dimension_semantics=("parallel",)),
    )(x_pad, w3_k, b3_k, w1_k, b1_k)
    return out.reshape(N, C, H, W)


# ----------------------------- params + pure-JAX reference -----------------------------
def init_resblock(key, in_channel, channel):
    k1, k2, k3, k4 = jax.random.split(key, 4)
    w3 = jax.random.normal(k1, (channel, in_channel, 3, 3), jnp.float32) / jnp.sqrt(in_channel * 9.0)
    b3 = jax.random.normal(k2, (channel,), jnp.float32) * 0.01
    w1 = jax.random.normal(k3, (in_channel, channel, 1, 1), jnp.float32) / jnp.sqrt(float(channel))
    b1 = jax.random.normal(k4, (in_channel,), jnp.float32) * 0.01
    return {"w3": w3, "b3": b3, "w1": w1, "b1": b1}


def resblock_reference(params, x):
    """Pure-JAX (XLA conv) reference of the PyTorch ResBlock forward."""
    dn = ("NCHW", "OIHW", "NCHW")
    h = jax.nn.relu(x)
    h = jax.lax.conv_general_dilated(h, params["w3"], (1, 1), ((1, 1), (1, 1)),
                                     dimension_numbers=dn)
    h = h + params["b3"][None, :, None, None]
    h = jax.nn.relu(h)
    h = jax.lax.conv_general_dilated(h, params["w1"], (1, 1), "VALID",
                                     dimension_numbers=dn)
    h = h + params["b1"][None, :, None, None]
    return h + x


# ----------------------------- main -----------------------------
if __name__ == "__main__":
    key = jax.random.PRNGKey(0)
    pkey, dkey = jax.random.split(key)
    params = init_resblock(pkey, IN_CHANNEL, RES_CHANNEL)
    x = jax.random.normal(dkey, (BATCH, IN_CHANNEL, HW, HW), jnp.float32)

    fwd = jax.jit(resblock_forward)
    out = fwd(params, x)
    jax.block_until_ready(out)
    assert out.shape == (BATCH, IN_CHANNEL, HW, HW)

    ref = resblock_reference(params, x)
    scale = float(jnp.maximum(1.0, jnp.max(jnp.abs(ref))))
    err = float(jnp.max(jnp.abs(out - ref)))
    # bf16 MXU inputs -> relative tolerance; f32 path keeps the tight bound.
    rel_tol = 1e-4 if MXU_INPUT_DTYPE == jnp.float32 else 5e-2
    assert err < rel_tol * scale, f"max abs error {err} (scale {scale}, tol {rel_tol * scale})"

    print("KERNEL_OK")
</pallas_src>

<mosaic_0001>
module attributes {stable_mosaic.version = 11 : i64} {
  func.func @_resblock_kernel(%arg0: i32, %arg1: memref<2x32x512xf32, #tpu.memory_space<vmem>>, %arg2: memref<16x288xbf16, #tpu.memory_space<vmem>>, %arg3: memref<16x1xf32, #tpu.memory_space<vmem>>, %arg4: memref<32x16xbf16, #tpu.memory_space<vmem>>, %arg5: memref<32x1xf32, #tpu.memory_space<vmem>>, %arg6: memref<2x32x256xf32, #tpu.memory_space<vmem>>) attributes {dimension_semantics = [#tpu.dimension_semantics<parallel>], iteration_bounds = array<i64: 2>, scalar_prefetch = 0 : i64, scratch_operands = 0 : i64, tpu.core_type = #tpu.core_type<tc>, window_params = [{transform_indices = @transform_0, window_bounds = array<i64: 2, 32, 512>}, {pipeline_mode = #tpu.pipeline_mode<synchronous>, transform_indices = @transform_1, window_bounds = array<i64: 16, 288>}, {pipeline_mode = #tpu.pipeline_mode<synchronous>, transform_indices = @transform_2, window_bounds = array<i64: 16, 1>}, {pipeline_mode = #tpu.pipeline_mode<synchronous>, transform_indices = @transform_3, window_bounds = array<i64: 32, 16>}, {pipeline_mode = #tpu.pipeline_mode<synchronous>, transform_indices = @transform_4, window_bounds = array<i64: 32, 1>}, {transform_indices = @transform_5, window_bounds = array<i64: 2, 32, 256>}]} {
    %0 = tpu.iota {dimensions = array<i32: 1>} : vector<1x512xi32>
    %c128_i32 = arith.constant 128 : i32
    %1 = vector.broadcast %c128_i32 : i32 to vector<1x512xi32>
    %2 = arith.subi %0, %1 : vector<1x512xi32>
    %c16_i32 = arith.constant 16 : i32
    %c0_i32 = arith.constant 0 : i32
    %3 = arith.cmpi eq, %c16_i32, %c0_i32 : i32
    %c1_i32 = arith.constant 1 : i32
    %4 = arith.select %3, %c1_i32, %c16_i32 : i32
    %5 = vector.broadcast %4 : i32 to vector<1x512xi32>
    %6 = arith.remsi %2, %5 : vector<1x512xi32>
    %c0_i32_0 = arith.constant 0 : i32
    %7 = vector.broadcast %c0_i32_0 : i32 to vector<1x512xi32>
    %8 = arith.cmpi ne, %6, %7 : vector<1x512xi32>
    %c0_i32_1 = arith.constant 0 : i32
    %9 = vector.broadcast %c0_i32_1 : i32 to vector<1x512xi32>
    %10 = arith.cmpi slt, %6, %9 : vector<1x512xi32>
    %c0_i32_2 = arith.constant 0 : i32
    %11 = arith.cmpi slt, %4, %c0_i32_2 : i32
    %12 = vector.broadcast %11 : i1 to vector<1x512xi1>
    %13 = vector.broadcast %12 : vector<1x512xi1> to vector<1x512xi1>
    %14 = arith.xori %10, %13 : vector<1x512xi1>
    %15 = arith.andi %14, %8 : vector<1x512xi1>
    %16 = vector.broadcast %4 : i32 to vector<1x512xi32>
    %17 = arith.addi %6, %16 : vector<1x512xi32>
    %18 = arith.select %15, %17, %6 : vector<1x512xi1>, vector<1x512xi32>
    %c15_i32 = arith.constant 15 : i32
    %19 = vector.broadcast %c15_i32 : i32 to vector<1x512xi32>
    %20 = arith.cmpi ne, %18, %19 : vector<1x512xi32>
    %c0_i32_3 = arith.constant 0 : i32
    %21 = vector.broadcast %c0_i32_3 : i32 to vector<1x512xi32>
    %22 = arith.cmpi ne, %18, %21 : vector<1x512xi32>
    %c0 = arith.constant 0 : index
    %c0_4 = arith.constant 0 : index
    %c0_5 = arith.constant 0 : index
    %23 = vector.load %arg1[%c0, %c0_4, %c0_5] : memref<2x32x512xf32, #tpu.memory_space<vmem>>, vector<1x32x512xf32>
    %24 = vector.shape_cast %23 : vector<1x32x512xf32> to vector<32x512xf32>
    %cst = arith.constant 0.000000e+00 : f32
    %25 = vector.broadcast %cst : f32 to vector<32x512xf32>
    %26 = arith.maximumf %24, %25 : vector<32x512xf32>
    %27 = arith.truncf %26 : vector<32x512xf32> to vector<32x512xbf16>
    %c0_i32_6 = arith.constant 0 : i32
    %28 = arith.sitofp %c0_i32_6 : i32 to bf16
    %29 = vector.shape_cast %20 : vector<1x512xi1> to vector<1x512xi1>
    %30 = vector.broadcast %29 : vector<1x512xi1> to vector<32x512xi1>
    %31 = vector.broadcast %28 : bf16 to vector<32x512xbf16>
    %32 = arith.select %30, %27, %31 : vector<32x512xi1>, vector<32x512xbf16>
    %c0_i32_7 = arith.constant 0 : i32
    %33 = arith.sitofp %c0_i32_7 : i32 to bf16
    %34 = vector.shape_cast %22 : vector<1x512xi1> to vector<1x512xi1>
    %35 = vector.broadcast %34 : vector<1x512xi1> to vector<32x512xi1>
    %36 = vector.broadcast %33 : bf16 to vector<32x512xbf16>
    %37 = arith.select %35, %27, %36 : vector<32x512xi1>, vector<32x512xbf16>
    %c1 = arith.constant 1 : index
    %c0_8 = arith.constant 0 : index
    %c0_9 = arith.constant 0 : index
    %38 = vector.load %arg1[%c1, %c0_8, %c0_9] : memref<2x32x512xf32, #tpu.memory_space<vmem>>, vector<1x32x512xf32>
    %39 = vector.shape_cast %38 : vector<1x32x512xf32> to vector<32x512xf32>
    %cst_10 = arith.constant 0.000000e+00 : f32
    %40 = vector.broadcast %cst_10 : f32 to vector<32x512xf32>
    %41 = arith.maximumf %39, %40 : vector<32x512xf32>
    %42 = arith.truncf %41 : vector<32x512xf32> to vector<32x512xbf16>
    %c0_i32_11 = arith.constant 0 : i32
    %43 = arith.sitofp %c0_i32_11 : i32 to bf16
    %44 = vector.shape_cast %20 : vector<1x512xi1> to vector<1x512xi1>
    %45 = vector.broadcast %44 : vector<1x512xi1> to vector<32x512xi1>
    %46 = vector.broadcast %43 : bf16 to vector<32x512xbf16>
    %47 = arith.select %45, %42, %46 : vector<32x512xi1>, vector<32x512xbf16>
    %c0_i32_12 = arith.constant 0 : i32
    %48 = arith.sitofp %c0_i32_12 : i32 to bf16
    %49 = vector.shape_cast %22 : vector<1x512xi1> to vector<1x512xi1>
    %50 = vector.broadcast %49 : vector<1x512xi1> to vector<32x512xi1>
    %51 = vector.broadcast %48 : bf16 to vector<32x512xbf16>
    %52 = arith.select %50, %42, %51 : vector<32x512xi1>, vector<32x512xbf16>
    %53 = vector.extract_strided_slice %32 {offsets = [0, 111], sizes = [32, 256], strides = [1, 1]} : vector<32x512xbf16> to vector<32x256xbf16>
    %54 = vector.extract_strided_slice %47 {offsets = [0, 111], sizes = [32, 256], strides = [1, 1]} : vector<32x512xbf16> to vector<32x256xbf16>
    %55 = tpu.concatenate %53, %54 in 1 : vector<32x256xbf16>, vector<32x256xbf16> -> vector<32x512xbf16>
    %56 = vector.extract_strided_slice %27 {offsets = [0, 112], sizes = [32, 256], strides = [1, 1]} : vector<32x512xbf16> to vector<32x256xbf16>
    %57 = vector.extract_strided_slice %42 {offsets = [0, 112], sizes = [32, 256], strides = [1, 1]} : vector<32x512xbf16> to vector<32x256xbf16>
    %58 = tpu.concatenate %56, %57 in 1 : vector<32x256xbf16>, vector<32x256xbf16> -> vector<32x512xbf16>
    %59 = vector.extract_strided_slice %37 {offsets = [0, 113], sizes = [32, 256], strides = [1, 1]} : vector<32x512xbf16> to vector<32x256xbf16>
    %60 = vector.extract_strided_slice %52 {offsets = [0, 113], sizes = [32, 256], strides = [1, 1]} : vector<32x512xbf16> to vector<32x256xbf16>
    %61 = tpu.concatenate %59, %60 in 1 : vector<32x256xbf16>, vector<32x256xbf16> -> vector<32x512xbf16>
    %62 = vector.extract_strided_slice %32 {offsets = [0, 127], sizes = [32, 256], strides = [1, 1]} : vector<32x512xbf16> to vector<32x256xbf16>
    %63 = vector.extract_strided_slice %47 {offsets = [0, 127], sizes = [32, 256], strides = [1, 1]} : vector<32x512xbf16> to vector<32x256xbf16>
    %64 = tpu.concatenate %62, %63 in 1 : vector<32x256xbf16>, vector<32x256xbf16> -> vector<32x512xbf16>
    %65 = vector.extract_strided_slice %27 {offsets = [0, 128], sizes = [32, 256], strides = [1, 1]} : vector<32x512xbf16> to vector<32x256xbf16>
    %66 = vector.extract_strided_slice %42 {offsets = [0, 128], sizes = [32, 256], strides = [1, 1]} : vector<32x512xbf16> to vector<32x256xbf16>
    %67 = tpu.concatenate %65, %66 in 1 : vector<32x256xbf16>, vector<32x256xbf16> -> vector<32x512xbf16>
    %68 = vector.extract_strided_slice %37 {offsets = [0, 129], sizes = [32, 256], strides = [1, 1]} : vector<32x512xbf16> to vector<32x256xbf16>
    %69 = vector.extract_strided_slice %52 {offsets = [0, 129], sizes = [32, 256], strides = [1, 1]} : vector<32x512xbf16> to vector<32x256xbf16>
    %70 = tpu.concatenate %68, %69 in 1 : vector<32x256xbf16>, vector<32x256xbf16> -> vector<32x512xbf16>
    %71 = vector.extract_strided_slice %32 {offsets = [0, 143], sizes = [32, 256], strides = [1, 1]} : vector<32x512xbf16> to vector<32x256xbf16>
    %72 = vector.extract_strided_slice %47 {offsets = [0, 143], sizes = [32, 256], strides = [1, 1]} : vector<32x512xbf16> to vector<32x256xbf16>
    %73 = tpu.concatenate %71, %72 in 1 : vector<32x256xbf16>, vector<32x256xbf16> -> vector<32x512xbf16>
    %74 = vector.extract_strided_slice %27 {offsets = [0, 144], sizes = [32, 256], strides = [1, 1]} : vector<32x512xbf16> to vector<32x256xbf16>
    %75 = vector.extract_strided_slice %42 {offsets = [0, 144], sizes = [32, 256], strides = [1, 1]} : vector<32x512xbf16> to vector<32x256xbf16>
    %76 = tpu.concatenate %74, %75 in 1 : vector<32x256xbf16>, vector<32x256xbf16> -> vector<32x512xbf16>
    %77 = vector.extract_strided_slice %37 {offsets = [0, 145], sizes = [32, 256], strides = [1, 1]} : vector<32x512xbf16> to vector<32x256xbf16>
    %78 = vector.extract_strided_slice %52 {offsets = [0, 145], sizes = [32, 256], strides = [1, 1]} : vector<32x512xbf16> to vector<32x256xbf16>
    %79 = tpu.concatenate %77, %78 in 1 : vector<32x256xbf16>, vector<32x256xbf16> -> vector<32x512xbf16>
    %80 = tpu.concatenate %55, %58, %61, %64, %67, %70, %73, %76, %79 in 0 : vector<32x512xbf16>, vector<32x512xbf16>, vector<32x512xbf16>, vector<32x512xbf16>, vector<32x512xbf16>, vector<32x512xbf16>, vector<32x512xbf16>, vector<32x512xbf16>, vector<32x512xbf16> -> vector<288x512xbf16>
    %c0_13 = arith.constant 0 : index
    %c0_14 = arith.constant 0 : index
    %81 = vector.load %arg2[%c0_13, %c0_14] : memref<16x288xbf16, #tpu.memory_space<vmem>>, vector<16x288xbf16>
    %cst_15 = arith.constant dense<0.000000e+00> : vector<16x512xf32>
    %82 = tpu.matmul %81, %80, %cst_15 {dimension_numbers = #tpu.dot_dimension_numbers<[1], [0], [0], [1], [0, 0, 1, 1], [], []>} : vector<16x288xbf16>, vector<288x512xbf16>, vector<16x512xf32> -> vector<16x512xf32>
    %c0_16 = arith.constant 0 : index
    %c0_17 = arith.constant 0 : index
    %83 = vector.load %arg3[%c0_16, %c0_17] : memref<16x1xf32, #tpu.memory_space<vmem>>, vector<16x1xf32>
    %84 = vector.broadcast %83 : vector<16x1xf32> to vector<16x512xf32>
    %85 = arith.addf %82, %84 : vector<16x512xf32>
    %cst_18 = arith.constant 0.000000e+00 : f32
    %86 = vector.broadcast %cst_18 : f32 to vector<16x512xf32>
    %87 = arith.maximumf %85, %86 : vector<16x512xf32>
    %c0_19 = arith.constant 0 : index
    %c0_20 = arith.constant 0 : index
    %88 = vector.load %arg4[%c0_19, %c0_20] : memref<32x16xbf16, #tpu.memory_space<vmem>>, vector<32x16xbf16>
    %89 = arith.truncf %87 : vector<16x512xf32> to vector<16x512xbf16>
    %cst_21 = arith.constant dense<0.000000e+00> : vector<32x512xf32>
    %90 = tpu.matmul %88, %89, %cst_21 {dimension_numbers = #tpu.dot_dimension_numbers<[1], [0], [0], [1], [0, 0, 1, 1], [], []>} : vector<32x16xbf16>, vector<16x512xbf16>, vector<32x512xf32> -> vector<32x512xf32>
    %c0_22 = arith.constant 0 : index
    %c0_23 = arith.constant 0 : index
    %91 = vector.load %arg5[%c0_22, %c0_23] : memref<32x1xf32, #tpu.memory_space<vmem>>, vector<32x1xf32>
    %92 = vector.broadcast %91 : vector<32x1xf32> to vector<32x512xf32>
    %93 = arith.addf %90, %92 : vector<32x512xf32>
    %c0_24 = arith.constant 0 : index
    %c0_25 = arith.constant 0 : index
    %c0_26 = arith.constant 0 : index
    %94 = vector.load %arg1[%c0_24, %c0_25, %c0_26] : memref<2x32x512xf32, #tpu.memory_space<vmem>>, vector<1x32x512xf32>
    %95 = vector.shape_cast %94 : vector<1x32x512xf32> to vector<32x512xf32>
    %96 = vector.extract_strided_slice %95 {offsets = [0, 128], sizes = [32, 256], strides = [1, 1]} : vector<32x512xf32> to vector<32x256xf32>
    %97 = vector.extract_strided_slice %93 {offsets = [0, 0], sizes = [32, 256], strides = [1, 1]} : vector<32x512xf32> to vector<32x256xf32>
    %98 = arith.addf %97, %96 : vector<32x256xf32>
    %c0_27 = arith.constant 0 : index
    %c0_28 = arith.constant 0 : index
    %c0_29 = arith.constant 0 : index
    %99 = vector.load %arg6[%c0_27, %c0_28, %c0_29] : memref<2x32x256xf32, #tpu.memory_space<vmem>>, vector<1x32x256xf32>
    %100 = vector.shape_cast %99 : vector<1x32x256xf32> to vector<32x256xf32>
    %101 = vector.shape_cast %98 : vector<32x256xf32> to vector<1x32x256xf32>
    tpu.vector_store %arg6[%c0_27, %c0_28, %c0_29], %101 {strides = array<i32>} : memref<2x32x256xf32, #tpu.memory_space<vmem>>, vector<1x32x256xf32>,
    %c1_30 = arith.constant 1 : index
    %c0_31 = arith.constant 0 : index
    %c0_32 = arith.constant 0 : index
    %102 = vector.load %arg1[%c1_30, %c0_31, %c0_32] : memref<2x32x512xf32, #tpu.memory_space<vmem>>, vector<1x32x512xf32>
    %103 = vector.shape_cast %102 : vector<1x32x512xf32> to vector<32x512xf32>
    %104 = vector.extract_strided_slice %103 {offsets = [0, 128], sizes = [32, 256], strides = [1, 1]} : vector<32x512xf32> to vector<32x256xf32>
    %105 = vector.extract_strided_slice %93 {offsets = [0, 256], sizes = [32, 256], strides = [1, 1]} : vector<32x512xf32> to vector<32x256xf32>
    %106 = arith.addf %105, %104 : vector<32x256xf32>
    %c1_33 = arith.constant 1 : index
    %c0_34 = arith.constant 0 : index
    %c0_35 = arith.constant 0 : index
    %107 = vector.load %arg6[%c1_33, %c0_34, %c0_35] : memref<2x32x256xf32, #tpu.memory_space<vmem>>, vector<1x32x256xf32>
    %108 = vector.shape_cast %107 : vector<1x32x256xf32> to vector<32x256xf32>
    %109 = vector.shape_cast %106 : vector<32x256xf32> to vector<1x32x256xf32>
    tpu.vector_store %arg6[%c1_33, %c0_34, %c0_35], %109 {strides = array<i32>} : memref<2x32x256xf32, #tpu.memory_space<vmem>>, vector<1x32x256xf32>,
    return
  }
  func.func @transform_0(%arg0: i32) -> (i32, i32, i32) {
    %c0_i32 = arith.constant 0 : i32
    %c0_i32_0 = arith.constant 0 : i32
    %c0_i32_1 = arith.constant 0 : i32
    return %arg0, %c0_i32, %c0_i32_0 : i32, i32, i32
  }
  func.func @transform_1(%arg0: i32) -> (i32, i32) {
    %c0_i32 = arith.constant 0 : i32
    %c0_i32_0 = arith.constant 0 : i32
    %c0_i32_1 = arith.constant 0 : i32
    return %c0_i32, %c0_i32_0 : i32, i32
  }
  func.func @transform_2(%arg0: i32) -> (i32, i32) {
    %c0_i32 = arith.constant 0 : i32
    %c0_i32_0 = arith.constant 0 : i32
    %c0_i32_1 = arith.constant 0 : i32
    return %c0_i32, %c0_i32_0 : i32, i32
  }
  func.func @transform_3(%arg0: i32) -> (i32, i32) {
    %c0_i32 = arith.constant 0 : i32
    %c0_i32_0 = arith.constant 0 : i32
    %c0_i32_1 = arith.constant 0 : i32
    return %c0_i32, %c0_i32_0 : i32, i32
  }
  func.func @transform_4(%arg0: i32) -> (i32, i32) {
    %c0_i32 = arith.constant 0 : i32
    %c0_i32_0 = arith.constant 0 : i32
    %c0_i32_1 = arith.constant 0 : i32
    return %c0_i32, %c0_i32_0 : i32, i32
  }
  func.func @transform_5(%arg0: i32) -> (i32, i32, i32) {
    %c0_i32 = arith.constant 0 : i32
    %c0_i32_0 = arith.constant 0 : i32
    %c0_i32_1 = arith.constant 0 : i32
    return %arg0, %c0_i32, %c0_i32_0 : i32, i32, i32
  }
}

</mosaic_0001>

<llo_original>
// kernel: resblock_forward.1
$region0: #{resblock_forward.1}
  #allocation0 [shape = 'u32[]', space=smem, size = 0x4, offset = 0x4, fixed_abs, tag = 'smem constant byte address 0x4 - core index']
  #allocation1 [shape = 'u32[144,128]{1,0:T(1,128)}', space=vmem, size = 0x12000, scoped, tag = 'internal scratch']
  %s0 = inlined_call_operand.vmem [shape: f32[4,32,512], index: 0, kind: input, shape index: {}]
  %s1 = inlined_call_operand.vmem [shape: bf16[16,288], index: 1, kind: input, shape index: {}]
  %s2 = inlined_call_operand.vmem [shape: f32[16,1], index: 2, kind: input, shape index: {}]
  %s3 = inlined_call_operand.vmem [shape: bf16[32,16], index: 3, kind: input, shape index: {}]
  %s4 = inlined_call_operand.vmem [shape: f32[32,1], index: 4, kind: input, shape index: {}]
  %s5 = inlined_call_operand.vmem [shape: f32[4,32,256], index: 5, kind: output, shape index: {}]
  %s6 = sld [smem:[#allocation0]]
  $region53: #{resblock_forward.1} parent=0
    _
  %s8 = ssub.s32 1, %s6
  %s9 = scalar_select 0, %s8, %s6
  loop: start=0, step=1, limit=4
  $region2: #{resblock_forward.1} parent=0 // loop_pre_header
    _
  $region3: #{resblock_forward.1} parent=0 // loop_header
    %s11 = sphi 0, %s15
    %p12 = scmp.ge.s32.totalorder %s11, 4
    %s21 = sphi 0, %s23
    %s24 = sphi 0, %s21
    %s25 = sphi 0, %s24
    %s41 = sphi 0, %s25
    %s45 = sphi 0, %s45
    %s47 = sphi 0, %s45
    %s48 = sphi 0, %s47
    %s62 = sphi 0, %s48
    %s66 = sphi 0, %s66
    %s68 = sphi 0, %s66
    %s69 = sphi 0, %s68
    %s83 = sphi 0, %s69
    %s87 = sphi 0, %s87
    %s89 = sphi 0, %s87
    %s90 = sphi 0, %s89
    %s104 = sphi 0, %s90
    %s108 = sphi 0, %s108
    %s110 = sphi 0, %s108
    %s111 = sphi 0, %s110
    %s125 = sphi 0, %s111
    %s131 = sphi 0, %s133
    %s134 = sphi 0, %s131
    %s135 = sphi 0, %s134
    %s151 = sphi 0, %s135
  $region4: #{resblock_forward.1} parent=0 // loop_header_branch
    %14 = sbr.rel (%p12) target = $region8
  $region5: #{resblock_forward.1} parent=0 // loop_body
    %s16 = ssub.s32 %s11, 1
    %s17 = ssub.s32 %s11, 2
    %s18 = sadd.s32 %s11, 1
    %s19 = ssub.s32 %s11, %s18
    %p20 = scmp.eq.s32.totalorder %s19, 0
    %s22 = sadd.s32 %s21, 1
    %s23 = scalar_select %p20, %s21, %s22
    %p26 = pneg %p20
    %p27 = scmp.eq.s32.totalorder %s11, 1
    %p28 = por %p26, %p27
    %p29 = scmp.ne.s32.totalorder %s21, %s24
    %p30 = scmp.eq.s32.totalorder %s11, 0
    %p31 = por %p29, %p30
    %p32 = scmp.ne.s32.totalorder %s21, %s24
    %p33 = scmp.eq.s32.totalorder %s16, 1
    %p34 = por %p32, %p33
    %p35 = scmp.ne.s32.totalorder %s24, %s25
    %p36 = scmp.eq.s32.totalorder %s16, 0
    %p37 = por %p35, %p36
    %p38 = scmp.ne.s32.totalorder %s24, %s25
    %p39 = scmp.eq.s32.totalorder %s17, 1
    %p40 = por %p38, %p39
    %p42 = scmp.ne.s32.totalorder %s25, %s41
    %p43 = scmp.eq.s32.totalorder %s17, 0
    %p44 = por %p42, %p43
    %s46 = sadd.s32 %s45, 1
    %p49 = scmp.eq.s32.totalorder %s11, 1
    %p50 = scmp.ne.s32.totalorder %s45, %s47
    %p51 = scmp.eq.s32.totalorder %s11, 0
    %p52 = por %p50, %p51
    %p53 = scmp.ne.s32.totalorder %s45, %s47
    %p54 = scmp.eq.s32.totalorder %s16, 1
    %p55 = por %p53, %p54
    %p56 = scmp.ne.s32.totalorder %s47, %s48
    %p57 = scmp.eq.s32.totalorder %s16, 0
    %p58 = por %p56, %p57
    %p59 = scmp.ne.s32.totalorder %s47, %s48
    %p60 = scmp.eq.s32.totalorder %s17, 1
    %p61 = por %p59, %p60
    %p63 = scmp.ne.s32.totalorder %s48, %s62
    %p64 = scmp.eq.s32.totalorder %s17, 0
    %p65 = por %p63, %p64
    %s67 = sadd.s32 %s66, 1
    %p70 = scmp.eq.s32.totalorder %s11, 1
    %p71 = scmp.ne.s32.totalorder %s66, %s68
    %p72 = scmp.eq.s32.totalorder %s11, 0
    %p73 = por %p71, %p72
    %p74 = scmp.ne.s32.totalorder %s66, %s68
    %p75 = scmp.eq.s32.totalorder %s16, 1
    %p76 = por %p74, %p75
    %p77 = scmp.ne.s32.totalorder %s68, %s69
    %p78 = scmp.eq.s32.totalorder %s16, 0
    %p79 = por %p77, %p78
    %p80 = scmp.ne.s32.totalorder %s68, %s69
    %p81 = scmp.eq.s32.totalorder %s17, 1
    %p82 = por %p80, %p81
    %p84 = scmp.ne.s32.totalorder %s69, %s83
    %p85 = scmp.eq.s32.totalorder %s17, 0
    %p86 = por %p84, %p85
    %s88 = sadd.s32 %s87, 1
    %p91 = scmp.eq.s32.totalorder %s11, 1
    %p92 = scmp.ne.s32.totalorder %s87, %s89
    %p93 = scmp.eq.s32.totalorder %s11, 0
    %p94 = por %p92, %p93
    %p95 = scmp.ne.s32.totalorder %s87, %s89
    %p96 = scmp.eq.s32.totalorder %s16, 1
    %p97 = por %p95, %p96
    %p98 = scmp.ne.s32.totalorder %s89, %s90
    %p99 = scmp.eq.s32.totalorder %s16, 0
    %p100 = por %p98, %p99
    %p101 = scmp.ne.s32.totalorder %s89, %s90
    %p102 = scmp.eq.s32.totalorder %s17, 1
    %p103 = por %p101, %p102
    %p105 = scmp.ne.s32.totalorder %s90, %s104
    %p106 = scmp.eq.s32.totalorder %s17, 0
    %p107 = por %p105, %p106
    %s109 = sadd.s32 %s108, 1
    %p112 = scmp.eq.s32.totalorder %s11, 1
    %p113 = scmp.ne.s32.totalorder %s108, %s110
    %p114 = scmp.eq.s32.totalorder %s11, 0
    %p115 = por %p113, %p114
    %p116 = scmp.ne.s32.totalorder %s108, %s110
    %p117 = scmp.eq.s32.totalorder %s16, 1
    %p118 = por %p116, %p117
    %p119 = scmp.ne.s32.totalorder %s110, %s111
    %p120 = scmp.eq.s32.totalorder %s16, 0
    %p121 = por %p119, %p120
    %p122 = scmp.ne.s32.totalorder %s110, %s111
    %p123 = scmp.eq.s32.totalorder %s17, 1
    %p124 = por %p122, %p123
    %p126 = scmp.ne.s32.totalorder %s111, %s125
    %p127 = scmp.eq.s32.totalorder %s17, 0
    %p128 = por %p126, %p127
    %s129 = ssub.s32 %s11, %s18
    %p130 = scmp.eq.s32.totalorder %s129, 0
    %s132 = sadd.s32 %s131, 1
    %s133 = scalar_select %p130, %s131, %s132
    %p136 = pneg %p130
    %p137 = scmp.eq.s32.totalorder %s11, 1
    %p138 = por %p136, %p137
    %p139 = scmp.ne.s32.totalorder %s131, %s134
    %p140 = scmp.eq.s32.totalorder %s11, 0
    %p141 = por %p139, %p140
    %p142 = scmp.ne.s32.totalorder %s131, %s134
    %p143 = scmp.eq.s32.totalorder %s16, 1
    %p144 = por %p142, %p143
    %p145 = scmp.ne.s32.totalorder %s134, %s135
    %p146 = scmp.eq.s32.totalorder %s16, 0
    %p147 = por %p145, %p146
    %p148 = scmp.ne.s32.totalorder %s134, %s135
    %p149 = scmp.eq.s32.totalorder %s17, 1
    %p150 = por %p148, %p149
    %p152 = scmp.ne.s32.totalorder %s135, %s151
    %p153 = scmp.eq.s32.totalorder %s17, 0
    %p154 = por %p152, %p153
    %p155 = scmp.le.s32.totalorder 1, %s11
    %p156 = scmp.lt.s32.totalorder %s11, 3
    %p157 = pnand %p155, %p156
    %p158 = pneg %p157
    // Predicated region
    $region9: #{resblock_forward.1} parent=5 // pred_check
      _
    $region10: #{resblock_forward.1} parent=5 // pred_check_branch
      %160 = sbr.rel (%p157) target = $region12
    $region11: #{resblock_forward.1} parent=5 // pred_region
      %s161 = ssub.s32 %s11, 1
      // Predicated region
      $region13: #{resblock_forward.1} parent=11 // pred_check
        %p162 = pneg %p58
      $region14: #{resblock_forward.1} parent=11 // pred_check_branch
        %164 = sbr.rel (%p162) target = $region16
      $region15: #{resblock_forward.1} parent=11 // pred_region
        _
      $region16: #{resblock_forward.1} parent=11 // pred_fallthru
        _
      // Predicated region
      $region17: #{resblock_forward.1} parent=11 // pred_check
        %p165 = pneg %p79
      $region18: #{resblock_forward.1} parent=11 // pred_check_branch
        %167 = sbr.rel (%p165) target = $region20
      $region19: #{resblock_forward.1} parent=11 // pred_region
        _
      $region20: #{resblock_forward.1} parent=11 // pred_fallthru
        _
      // Predicated region
      $region21: #{resblock_forward.1} parent=11 // pred_check
        %p168 = pneg %p100
      $region22: #{resblock_forward.1} parent=11 // pred_check_branch
        %170 = sbr.rel (%p168) target = $region24
      $region23: #{resblock_forward.1} parent=11 // pred_region
        _
      $region24: #{resblock_forward.1} parent=11 // pred_fallthru
        _
      // Predicated region
      $region25: #{resblock_forward.1} parent=11 // pred_check
        %p171 = pneg %p121
      $region26: #{resblock_forward.1} parent=11 // pred_check_branch
        %173 = sbr.rel (%p171) target = $region28
      $region27: #{resblock_forward.1} parent=11 // pred_region
        _
      $region28: #{resblock_forward.1} parent=11 // pred_fallthru
        _
    $region12: #{resblock_forward.1} parent=5 // pred_fallthru
      _
    %p174 = scmp.lt.s32.totalorder %s11, 2
    // Predicated region
    $region29: #{resblock_forward.1} parent=5 // pred_check
      %p175 = pneg %p174
    $region30: #{resblock_forward.1} parent=5 // pred_check_branch
      %177 = sbr.rel (%p175) target = $region32
    $region31: #{resblock_forward.1} parent=5 // pred_region
      // Predicated region
      $region33: #{resblock_forward.1} parent=31 // pred_check
        %p178 = pneg %p31
      $region34: #{resblock_forward.1} parent=31 // pred_check_branch
        %180 = sbr.rel (%p178) target = $region36
      $region35: #{resblock_forward.1} parent=31 // pred_region
        %s181 = smul.u32 2, %s11
        %p182 = scmp.lt.s32.totalorder %s181, 3
        %s183 = scalar_select %p182, %s181, 3
        %s184 = smul.addr %s183, 16
        %s185 = smul.addr %s184, 8
        %s186 = scalar_lea.vmem %s0, %s185
        %s187 = smul.u32 2, %s11
      $region36: #{resblock_forward.1} parent=31 // pred_fallthru
        _
    $region32: #{resblock_forward.1} parent=5 // pred_fallthru
      _
    %p188 = scmp.le.s32.totalorder 1, %s11
    %p189 = scmp.lt.s32.totalorder %s11, 3
    %p190 = pnand %p188, %p189
    %p191 = pneg %p190
    // Predicated region
    $region37: #{resblock_forward.1} parent=5 // pred_check
      _
    $region38: #{resblock_forward.1} parent=5 // pred_check_branch
      %193 = sbr.rel (%p190) target = $region40
    $region39: #{resblock_forward.1} parent=5 // pred_region
      %s194 = ssub.s32 %s11, 1
      %s195 = smul.u32 2, %s16
      %p196 = scmp.lt.s32.totalorder %s195, 3
      %s197 = scalar_select %p196, %s195, 3
      %s198 = smul.addr %s197, 16
      %s199 = smul.addr %s198, 8
      %s200 = scalar_lea.vmem %s0, %s199
      %p201 = pneg %p37
      %p202 = pneg %p34
      %p203 = pneg %p58
      %p204 = pneg %p55
      %p205 = pneg %p79
      %p206 = pneg %p76
      %p207 = pneg %p100
      %p208 = pneg %p97
      %p209 = pneg %p121
      %p210 = pneg %p118
      %p211 = pneg %p147
      %p212 = pneg %p144
      %s213 = smul.u32 2, %s16
      %p214 = scmp.lt.s32.totalorder %s213, 3
      %s215 = scalar_select %p214, %s213, 3
      %s216 = smul.addr %s215, 8
      %s217 = smul.addr %s216, 8
      %s218 = scalar_lea.vmem %s5, %s217
      %s219 = smul.u32 2, %s16
      %p220 = scmp.lt.s32.totalorder %s219, 3
      %s221 = scalar_select %p220, %s219, 3
      %s222 = smul.addr %s221, 16
      %s223 = smul.addr %s222, 8
      %s224 = scalar_lea.vmem %s0, %s223
      %s225 = smul.u32 2, %s16
      %s226 = smul.u32 2, %s16
      %p227 = scmp.lt.s32.totalorder %s226, 3
      %s228 = scalar_select %p227, %s226, 3
      %s229 = smul.addr %s228, 8
      %s230 = smul.addr %s229, 8
      %s231 = scalar_lea.vmem %s5, %s230
      %s232 = smul.u32 2, %s16
      %v236 = vlaneseq
      %v237 = vand.u32 %v236, 127
      %v238 = vadd.s32 %v237, 256
      %v239 = vadd.s32 %v237, 384
      %v240 = vsub.s32 %v237, 128
      %v241 = vsub.s32 %v238, 128
      %v242 = vsub.s32 %v239, 128
      %vm243 = vcmp.lt.s32.totalorder %v240, 0
      %v244 = vsub.s32 0, %v240
      %v245 = vsel %vm243, %v244, %v240
      %v246 = vshrl.u32 %v245, 4
      %v247 = vand.u32 %v245, 15
      %v248 = vsub.s32 0, %v247
      %v249 = vsel %vm243, %v248, %v247
      %vm250 = vcmp.lt.s32.totalorder %v237, 0
      %v251 = vsub.s32 0, %v237
      %v252 = vsel %vm250, %v251, %v237
      %v253 = vshrl.u32 %v252, 4
      %v254 = vand.u32 %v252, 15
      %v255 = vsub.s32 0, %v254
      %v256 = vsel %vm250, %v255, %v254
      %vm257 = vcmp.lt.s32.totalorder %v241, 0
      %v258 = vsub.s32 0, %v241
      %v259 = vsel %vm257, %v258, %v241
      %v260 = vshrl.u32 %v259, 4
      %v261 = vand.u32 %v259, 15
      %v262 = vsub.s32 0, %v261
      %v263 = vsel %vm257, %v262, %v261
      %vm264 = vcmp.lt.s32.totalorder %v242, 0
      %v265 = vsub.s32 0, %v242
      %v266 = vsel %vm264, %v265, %v242
      %v267 = vshrl.u32 %v266, 4
      %v268 = vand.u32 %v266, 15
      %v269 = vsub.s32 0, %v268
      %v270 = vsel %vm264, %v269, %v268
      %vm271 = vcmp.ne.s32.totalorder %v249, 0
      %vm272 = vcmp.ne.s32.totalorder %v256, 0
      %vm273 = vcmp.ne.s32.totalorder %v263, 0
      %vm274 = vcmp.ne.s32.totalorder %v270, 0
      %vm275 = vcmp.lt.s32.totalorder %v249, 0
      %vm276 = vcmp.lt.s32.totalorder %v256, 0
      %vm277 = vcmp.lt.s32.totalorder %v263, 0
      %vm278 = vcmp.lt.s32.totalorder %v270, 0
      %vm279 = vmand %vm275, %vm271
      %vm280 = vmand %vm276, %vm272
      %vm281 = vmand %vm277, %vm273
      %vm282 = vmand %vm278, %vm274
      %v283 = vadd.s32 %v249, 16
      %v284 = vadd.s32 %v256, 16
      %v285 = vadd.s32 %v263, 16
      %v286 = vadd.s32 %v270, 16
      %v287 = vsel %vm279, %v283, %v249
      %v288 = vsel %vm280, %v284, %v256
      %v289 = vsel %vm281, %v285, %v263
      %v290 = vsel %vm282, %v286, %v270
      %vm291 = vcmp.ne.s32.totalorder %v287, 15
      %vm292 = vcmp.ne.s32.totalorder %v288, 15
      %vm293 = vcmp.ne.s32.totalorder %v289, 15
      %vm294 = vcmp.ne.s32.totalorder %v290, 15
      %vm295 = vcmp.ne.s32.totalorder %v287, 0
      %vm296 = vcmp.ne.s32.totalorder %v288, 0
      %vm297 = vcmp.ne.s32.totalorder %v289, 0
      %vm298 = vcmp.ne.s32.totalorder %v290, 0
      %v299 = vld [vmem:[%s224] sm:$0xff]
      %v300 = vld [vmem:[%s224 + $0x8] sm:$0xff]
      %v301 = vld [vmem:[%s224 + $0x10] sm:$0xff]
      %v302 = vld [vmem:[%s224 + $0x18] sm:$0xff]
      %v303 = vld [vmem:[%s224 + $0x20] sm:$0xff]
      %v304 = vld [vmem:[%s224 + $0x28] sm:$0xff]
      %v305 = vld [vmem:[%s224 + $0x30] sm:$0xff]
      %v306 = vld [vmem:[%s224 + $0x38] sm:$0xff]
      %v307 = vld [vmem:[%s224 + $0x40] sm:$0xff]
      %v308 = vld [vmem:[%s224 + $0x48] sm:$0xff]
      %v309 = vld [vmem:[%s224 + $0x50] sm:$0xff]
      %v310 = vld [vmem:[%s224 + $0x58] sm:$0xff]
      %v311 = vld [vmem:[%s224 + $0x60] sm:$0xff]
      %v312 = vld [vmem:[%s224 + $0x68] sm:$0xff]
      %v313 = vld [vmem:[%s224 + $0x70] sm:$0xff]
      %v314 = vld [vmem:[%s224 + $0x78] sm:$0xff]
      %v315 = vmax.f32 %v299, 0.0
      %v316 = vmax.f32 %v300, 0.0
      %v317 = vmax.f32 %v301, 0.0
      %v318 = vmax.f32 %v302, 0.0
      %v319 = vmax.f32 %v303, 0.0
      %v320 = vmax.f32 %v304, 0.0
      %v321 = vmax.f32 %v305, 0.0
      %v322 = vmax.f32 %v306, 0.0
      %v323 = vmax.f32 %v307, 0.0
      %v324 = vmax.f32 %v308, 0.0
      %v325 = vmax.f32 %v309, 0.0
      %v326 = vmax.f32 %v310, 0.0
      %v327 = vmax.f32 %v311, 0.0
      %v328 = vmax.f32 %v312, 0.0
      %v329 = vmax.f32 %v313, 0.0
      %v330 = vmax.f32 %v314, 0.0
      %v331 = vpack.c.bf16 %v319, %v315
      %v332 = vpack.c.bf16 %v320, %v316
      %v333 = vpack.c.bf16 %v321, %v317
      %v334 = vpack.c.bf16 %v322, %v318
      %v335 = vpack.c.bf16 %v327, %v323
      %v336 = vpack.c.bf16 %v328, %v324
      %v337 = vpack.c.bf16 %v329, %v325
      %v338 = vpack.c.bf16 %v330, %v326
      %v339 = vsel %vm291, 1, 0
      %v340 = vsel %vm292, 1, 0
      %v341 = vsel %vm293, 1, 0
      %v342 = vsel %vm294, 1, 0
      %vm343 = vcmp.eq.s32.totalorder %v339, 1
      %vm344 = vcmp.eq.s32.totalorder %v340, 1
      %vm345 = vcmp.eq.s32.totalorder %v341, 1
      %vm346 = vcmp.eq.s32.totalorder %v342, 1
      %vm347 = vmpackc.low %vm344, %vm343
      %vm348 = vmpackc.low %vm346, %vm345
      %v349 = vsel %vm347, 65537, 0
      %v350 = vsel %vm348, 65537, 0
      %v351 = vlaneseq
      %v352 = vshrl.u32 %v351, 7
      %v353 = vsub.s32 0, %v352
      %v354 = vrot.slane %v349, %v353
      %v355 = vlaneseq
      %v356 = vshrl.u32 %v355, 7
      %v357 = vsub.s32 4, %v356
      %v358 = vrot.slane %v349, %v357
      %v359 = vlaneseq
      %v360 = vshrl.u32 %v359, 7
      %v361 = vsub.s32 0, %v360
      %v362 = vrot.slane %v350, %v361
      %v363 = vlaneseq
      %v364 = vshrl.u32 %v363, 7
      %v365 = vsub.s32 4, %v364
      %v366 = vrot.slane %v350, %v365
      %vm367 = vcmp.ne.s16.totalorder %v354, 0
      %vm368 = vcmp.ne.s16.totalorder %v358, 0
      %vm369 = vcmp.ne.s16.totalorder %v362, 0
      %vm370 = vcmp.ne.s16.totalorder %v366, 0
      %v371 = vsel %vm367, %v331, 0
      %v372 = vsel %vm368, %v332, 0
      %v373 = vsel %vm369, %v333, 0
      %v374 = vsel %vm370, %v334, 0
      %v375 = vsel %vm367, %v335, 0
      %v376 = vsel %vm368, %v336, 0
      %v377 = vsel %vm369, %v337, 0
      %v378 = vsel %vm370, %v338, 0
      %v379 = vsel %vm295, 1, 0
      %v380 = vsel %vm296, 1, 0
      %v381 = vsel %vm297, 1, 0
      %v382 = vsel %vm298, 1, 0
      %vm383 = vcmp.eq.s32.totalorder %v379, 1
      %vm384 = vcmp.eq.s32.totalorder %v380, 1
      %vm385 = vcmp.eq.s32.totalorder %v381, 1
      %vm386 = vcmp.eq.s32.totalorder %v382, 1
      %vm387 = vmpackc.low %vm384, %vm383
      %vm388 = vmpackc.low %vm386, %vm385
      %v389 = vsel %vm387, 65537, 0
      %v390 = vsel %vm388, 65537, 0
      %v391 = vlaneseq
      %v392 = vshrl.u32 %v391, 7
      %v393 = vsub.s32 0, %v392
      %v394 = vrot.slane %v389, %v393
      %v395 = vlaneseq
      %v396 = vshrl.u32 %v395, 7
      %v397 = vsub.s32 4, %v396
      %v398 = vrot.slane %v389, %v397
      %v399 = vlaneseq
      %v400 = vshrl.u32 %v399, 7
      %v401 = vsub.s32 0, %v400
      %v402 = vrot.slane %v390, %v401
      %v403 = vlaneseq
      %v404 = vshrl.u32 %v403, 7
      %v405 = vsub.s32 4, %v404
      %v406 = vrot.slane %v390, %v405
      %vm407 = vcmp.ne.s16.totalorder %v394, 0
      %vm408 = vcmp.ne.s16.totalorder %v398, 0
      %vm409 = vcmp.ne.s16.totalorder %v402, 0
      %vm410 = vcmp.ne.s16.totalorder %v406, 0
      %v411 = vsel %vm407, %v331, 0
      %v412 = vsel %vm408, %v332, 0
      %v413 = vsel %vm409, %v333, 0
      %v414 = vsel %vm410, %v334, 0
      %v415 = vsel %vm407, %v335, 0
      %v416 = vsel %vm408, %v336, 0
      %v417 = vsel %vm409, %v337, 0
      %v418 = vsel %vm410, %v338, 0
      %s419 = scalar_lea.vmem %s224, 128
      %v420 = vld [vmem:[%s419] sm:$0xff]
      %v421 = vld [vmem:[%s419 + $0x8] sm:$0xff]
      %v422 = vld [vmem:[%s419 + $0x10] sm:$0xff]
      %v423 = vld [vmem:[%s419 + $0x18] sm:$0xff]
      %v424 = vld [vmem:[%s419 + $0x20] sm:$0xff]
      %v425 = vld [vmem:[%s419 + $0x28] sm:$0xff]
      %v426 = vld [vmem:[%s419 + $0x30] sm:$0xff]
      %v427 = vld [vmem:[%s419 + $0x38] sm:$0xff]
      %v428 = vld [vmem:[%s419 + $0x40] sm:$0xff]
      %v429 = vld [vmem:[%s419 + $0x48] sm:$0xff]
      %v430 = vld [vmem:[%s419 + $0x50] sm:$0xff]
      %v431 = vld [vmem:[%s419 + $0x58] sm:$0xff]
      %v432 = vld [vmem:[%s419 + $0x60] sm:$0xff]
      %v433 = vld [vmem:[%s419 + $0x68] sm:$0xff]
      %v434 = vld [vmem:[%s419 + $0x70] sm:$0xff]
      %v435 = vld [vmem:[%s419 + $0x78] sm:$0xff]
      %v436 = vmax.f32 %v420, 0.0
      %v437 = vmax.f32 %v421, 0.0
      %v438 = vmax.f32 %v422, 0.0
      %v439 = vmax.f32 %v423, 0.0
      %v440 = vmax.f32 %v424, 0.0
      %v441 = vmax.f32 %v425, 0.0
      %v442 = vmax.f32 %v426, 0.0
      %v443 = vmax.f32 %v427, 0.0
      %v444 = vmax.f32 %v428, 0.0
      %v445 = vmax.f32 %v429, 0.0
      %v446 = vmax.f32 %v430, 0.0
      %v447 = vmax.f32 %v431, 0.0
      %v448 = vmax.f32 %v432, 0.0
      %v449 = vmax.f32 %v433, 0.0
      %v450 = vmax.f32 %v434, 0.0
      %v451 = vmax.f32 %v435, 0.0
      %v452 = vpack.c.bf16 %v440, %v436
      %v453 = vpack.c.bf16 %v441, %v437
      %v454 = vpack.c.bf16 %v442, %v438
      %v455 = vpack.c.bf16 %v443, %v439
      %v456 = vpack.c.bf16 %v448, %v444
      %v457 = vpack.c.bf16 %v449, %v445
      %v458 = vpack.c.bf16 %v450, %v446
      %v459 = vpack.c.bf16 %v451, %v447
      %v460 = vsel %vm367, %v452, 0
      %v461 = vsel %vm368, %v453, 0
      %v462 = vsel %vm369, %v454, 0
      %v463 = vsel %vm370, %v455, 0
      %v464 = vsel %vm367, %v456, 0
      %v465 = vsel %vm368, %v457, 0
      %v466 = vsel %vm369, %v458, 0
      %v467 = vsel %vm370, %v459, 0
      %v468 = vsel %vm407, %v452, 0
      %v469 = vsel %vm408, %v453, 0
      %v470 = vsel %vm409, %v454, 0
      %v471 = vsel %vm410, %v455, 0
      %v472 = vsel %vm407, %v456, 0
      %v473 = vsel %vm408, %v457, 0
      %v474 = vsel %vm409, %v458, 0
      %v475 = vsel %vm410, %v459, 0
      %482 = vrot.lane.b32.xlu0 %v371, 17
      %v483 = vpop.permute.xlu0 %482
      %484 = vrot.lane.b32.xlu0 %v372, 17
      %v485 = vpop.permute.xlu0 %484
      %486 = vrot.lane.b32.xlu0 %v373, 17
      %v487 = vpop.permute.xlu0 %486
      %488 = vrot.lane.b32.xlu0 %v375, 17
      %v489 = vpop.permute.xlu0 %488
      %490 = vrot.lane.b32.xlu0 %v376, 17
      %v491 = vpop.permute.xlu0 %490
      %492 = vrot.lane.b32.xlu0 %v377, 17
      %v493 = vpop.permute.xlu0 %492
      %vm494 = vcmask 138240
      %v495 = vsel %vm494, %v483, %v485
      %v496 = vsel %vm494, %v485, %v487
      %v497 = vsel %vm494, %v489, %v491
      %v498 = vsel %vm494, %v491, %v493
      %509 = vrot.lane.b32.xlu0 %v460, 17
      %v510 = vpop.permute.xlu0 %509
      %511 = vrot.lane.b32.xlu0 %v461, 17
      %v512 = vpop.permute.xlu0 %511
      %513 = vrot.lane.b32.xlu0 %v462, 17
      %v514 = vpop.permute.xlu0 %513
      %515 = vrot.lane.b32.xlu0 %v464, 17
      %v516 = vpop.permute.xlu0 %515
      %517 = vrot.lane.b32.xlu0 %v465, 17
      %v518 = vpop.permute.xlu0 %517
      %519 = vrot.lane.b32.xlu0 %v466, 17
      %v520 = vpop.permute.xlu0 %519
      %v521 = vsel %vm494, %v510, %v512
      %v522 = vsel %vm494, %v512, %v514
      %v523 = vsel %vm494, %v516, %v518
      %v524 = vsel %vm494, %v518, %v520
      %535 = vrot.lane.b32.xlu0 %v331, 16
      %v536 = vpop.permute.xlu0 %535
      %537 = vrot.lane.b32.xlu0 %v332, 16
      %v538 = vpop.permute.xlu0 %537
      %539 = vrot.lane.b32.xlu0 %v333, 16
      %v540 = vpop.permute.xlu0 %539
      %541 = vrot.lane.b32.xlu0 %v335, 16
      %v542 = vpop.permute.xlu0 %541
      %543 = vrot.lane.b32.xlu0 %v336, 16
      %v544 = vpop.permute.xlu0 %543
      %545 = vrot.lane.b32.xlu0 %v337, 16
      %v546 = vpop.permute.xlu0 %545
      %vm547 = vcmask 130048
      %v548 = vsel %vm547, %v536, %v538
      %v549 = vsel %vm547, %v538, %v540
      %v550 = vsel %vm547, %v542, %v544
      %v551 = vsel %vm547, %v544, %v546
      %562 = vrot.lane.b32.xlu0 %v452, 16
      %v563 = vpop.permute.xlu0 %562
      %564 = vrot.lane.b32.xlu0 %v453, 16
      %v565 = vpop.permute.xlu0 %564
      %566 = vrot.lane.b32.xlu0 %v454, 16
      %v567 = vpop.permute.xlu0 %566
      %568 = vrot.lane.b32.xlu0 %v456, 16
      %v569 = vpop.permute.xlu0 %568
      %570 = vrot.lane.b32.xlu0 %v457, 16
      %v571 = vpop.permute.xlu0 %570
      %572 = vrot.lane.b32.xlu0 %v458, 16
      %v573 = vpop.permute.xlu0 %572
      %v574 = vsel %vm547, %v563, %v565
      %v575 = vsel %vm547, %v565, %v567
      %v576 = vsel %vm547, %v569, %v571
      %v577 = vsel %vm547, %v571, %v573
      %588 = vrot.lane.b32.xlu0 %v411, 15
      %v589 = vpop.permute.xlu0 %588
      %590 = vrot.lane.b32.xlu0 %v412, 15
      %v591 = vpop.permute.xlu0 %590
      %592 = vrot.lane.b32.xlu0 %v413, 15
      %v593 = vpop.permute.xlu0 %592
      %594 = vrot.lane.b32.xlu0 %v415, 15
      %v595 = vpop.permute.xlu0 %594
      %596 = vrot.lane.b32.xlu0 %v416, 15
      %v597 = vpop.permute.xlu0 %596
      %598 = vrot.lane.b32.xlu0 %v417, 15
      %v599 = vpop.permute.xlu0 %598
      %vm600 = vcmask 121856
      %v601 = vsel %vm600, %v589, %v591
      %v602 = vsel %vm600, %v591, %v593
      %v603 = vsel %vm600, %v595, %v597
      %v604 = vsel %vm600, %v597, %v599
      %615 = vrot.lane.b32.xlu0 %v468, 15
      %v616 = vpop.permute.xlu0 %615
      %617 = vrot.lane.b32.xlu0 %v469, 15
      %v618 = vpop.permute.xlu0 %617
      %619 = vrot.lane.b32.xlu0 %v470, 15
      %v620 = vpop.permute.xlu0 %619
      %621 = vrot.lane.b32.xlu0 %v472, 15
      %v622 = vpop.permute.xlu0 %621
      %623 = vrot.lane.b32.xlu0 %v473, 15
      %v624 = vpop.permute.xlu0 %623
      %625 = vrot.lane.b32.xlu0 %v474, 15
      %v626 = vpop.permute.xlu0 %625
      %v627 = vsel %vm600, %v616, %v618
      %v628 = vsel %vm600, %v618, %v620
      %v629 = vsel %vm600, %v622, %v624
      %v630 = vsel %vm600, %v624, %v626
      %635 = vrot.lane.b32.xlu0 %v371, 1
      %v636 = vpop.permute.xlu0 %635
      %637 = vrot.lane.b32.xlu0 %v372, 1
      %v638 = vpop.permute.xlu0 %637
      %639 = vrot.lane.b32.xlu0 %v373, 1
      %v640 = vpop.permute.xlu0 %639
      %641 = vrot.lane.b32.xlu0 %v375, 1
      %v642 = vpop.permute.xlu0 %641
      %643 = vrot.lane.b32.xlu0 %v376, 1
      %v644 = vpop.permute.xlu0 %643
      %645 = vrot.lane.b32.xlu0 %v377, 1
      %v646 = vpop.permute.xlu0 %645
      %vm647 = vcmask 7168
      %v648 = vsel %vm647, %v636, %v638
      %v649 = vsel %vm647, %v638, %v640
      %v650 = vsel %vm647, %v642, %v644
      %v651 = vsel %vm647, %v644, %v646
      %656 = vrot.lane.b32.xlu0 %v460, 1
      %v657 = vpop.permute.xlu0 %656
      %658 = vrot.lane.b32.xlu0 %v461, 1
      %v659 = vpop.permute.xlu0 %658
      %660 = vrot.lane.b32.xlu0 %v462, 1
      %v661 = vpop.permute.xlu0 %660
      %662 = vrot.lane.b32.xlu0 %v464, 1
      %v663 = vpop.permute.xlu0 %662
      %664 = vrot.lane.b32.xlu0 %v465, 1
      %v665 = vpop.permute.xlu0 %664
      %666 = vrot.lane.b32.xlu0 %v466, 1
      %v667 = vpop.permute.xlu0 %666
      %v668 = vsel %vm647, %v657, %v659
      %v669 = vsel %vm647, %v659, %v661
      %v670 = vsel %vm647, %v663, %v665
      %v671 = vsel %vm647, %v665, %v667
      %678 = vrot.lane.b32.xlu0 %v412, 127
      %v679 = vpop.permute.xlu0 %678
      %680 = vrot.lane.b32.xlu0 %v413, 127
      %v681 = vpop.permute.xlu0 %680
      %682 = vrot.lane.b32.xlu0 %v414, 127
      %v683 = vpop.permute.xlu0 %682
      %684 = vrot.lane.b32.xlu0 %v416, 127
      %v685 = vpop.permute.xlu0 %684
      %686 = vrot.lane.b32.xlu0 %v417, 127
      %v687 = vpop.permute.xlu0 %686
      %688 = vrot.lane.b32.xlu0 %v418, 127
      %v689 = vpop.permute.xlu0 %688
      %vm690 = vcmask 1039360
      %v691 = vsel %vm690, %v679, %v681
      %v692 = vsel %vm690, %v681, %v683
      %v693 = vsel %vm690, %v685, %v687
      %v694 = vsel %vm690, %v687, %v689
      %701 = vrot.lane.b32.xlu0 %v469, 127
      %v702 = vpop.permute.xlu0 %701
      %703 = vrot.lane.b32.xlu0 %v470, 127
      %v704 = vpop.permute.xlu0 %703
      %705 = vrot.lane.b32.xlu0 %v471, 127
      %v706 = vpop.permute.xlu0 %705
      %707 = vrot.lane.b32.xlu0 %v473, 127
      %v708 = vpop.permute.xlu0 %707
      %709 = vrot.lane.b32.xlu0 %v474, 127
      %v710 = vpop.permute.xlu0 %709
      %711 = vrot.lane.b32.xlu0 %v475, 127
      %v712 = vpop.permute.xlu0 %711
      %v713 = vsel %vm690, %v702, %v704
      %v714 = vsel %vm690, %v704, %v706
      %v715 = vsel %vm690, %v708, %v710
      %v716 = vsel %vm690, %v710, %v712
      %723 = vrot.lane.b32.xlu0 %v372, 113
      %v724 = vpop.permute.xlu0 %723
      %725 = vrot.lane.b32.xlu0 %v373, 113
      %v726 = vpop.permute.xlu0 %725
      %727 = vrot.lane.b32.xlu0 %v374, 113
      %v728 = vpop.permute.xlu0 %727
      %729 = vrot.lane.b32.xlu0 %v376, 113
      %v730 = vpop.permute.xlu0 %729
      %731 = vrot.lane.b32.xlu0 %v377, 113
      %v732 = vpop.permute.xlu0 %731
      %733 = vrot.lane.b32.xlu0 %v378, 113
      %v734 = vpop.permute.xlu0 %733
      %vm735 = vcmask 924672
      %v736 = vsel %vm735, %v724, %v726
      %v737 = vsel %vm735, %v726, %v728
      %v738 = vsel %vm735, %v730, %v732
      %v739 = vsel %vm735, %v732, %v734
      %746 = vrot.lane.b32.xlu0 %v461, 113
      %v747 = vpop.permute.xlu0 %746
      %748 = vrot.lane.b32.xlu0 %v462, 113
      %v749 = vpop.permute.xlu0 %748
      %750 = vrot.lane.b32.xlu0 %v463, 113
      %v751 = vpop.permute.xlu0 %750
      %752 = vrot.lane.b32.xlu0 %v465, 113
      %v753 = vpop.permute.xlu0 %752
      %754 = vrot.lane.b32.xlu0 %v466, 113
      %v755 = vpop.permute.xlu0 %754
      %756 = vrot.lane.b32.xlu0 %v467, 113
      %v757 = vpop.permute.xlu0 %756
      %v758 = vsel %vm735, %v747, %v749
      %v759 = vsel %vm735, %v749, %v751
      %v760 = vsel %vm735, %v753, %v755
      %v761 = vsel %vm735, %v755, %v757
      %768 = vrot.lane.b32.xlu0 %v332, 112
      %v769 = vpop.permute.xlu0 %768
      %770 = vrot.lane.b32.xlu0 %v333, 112
      %v771 = vpop.permute.xlu0 %770
      %772 = vrot.lane.b32.xlu0 %v334, 112
      %v773 = vpop.permute.xlu0 %772
      %774 = vrot.lane.b32.xlu0 %v336, 112
      %v775 = vpop.permute.xlu0 %774
      %776 = vrot.lane.b32.xlu0 %v337, 112
      %v777 = vpop.permute.xlu0 %776
      %778 = vrot.lane.b32.xlu0 %v338, 112
      %v779 = vpop.permute.xlu0 %778
      %vm780 = vcmask 916480
      %v781 = vsel %vm780, %v769, %v771
      %v782 = vsel %vm780, %v771, %v773
      %v783 = vsel %vm780, %v775, %v777
      %v784 = vsel %vm780, %v777, %v779
      %791 = vrot.lane.b32.xlu0 %v453, 112
      %v792 = vpop.permute.xlu0 %791
      %793 = vrot.lane.b32.xlu0 %v454, 112
      %v794 = vpop.permute.xlu0 %793
      %795 = vrot.lane.b32.xlu0 %v455, 112
      %v796 = vpop.permute.xlu0 %795
      %797 = vrot.lane.b32.xlu0 %v457, 112
      %v798 = vpop.permute.xlu0 %797
      %799 = vrot.lane.b32.xlu0 %v458, 112
      %v800 = vpop.permute.xlu0 %799
      %801 = vrot.lane.b32.xlu0 %v459, 112
      %v802 = vpop.permute.xlu0 %801
      %v803 = vsel %vm780, %v792, %v794
      %v804 = vsel %vm780, %v794, %v796
      %v805 = vsel %vm780, %v798, %v800
      %v806 = vsel %vm780, %v800, %v802
      %811 = vrot.lane.b32.xlu0 %v412, 111
      %v812 = vpop.permute.xlu0 %811
      %813 = vrot.lane.b32.xlu0 %v413, 111
      %v814 = vpop.permute.xlu0 %813
      %815 = vrot.lane.b32.xlu0 %v414, 111
      %v816 = vpop.permute.xlu0 %815
      %817 = vrot.lane.b32.xlu0 %v416, 111
      %v818 = vpop.permute.xlu0 %817
      %819 = vrot.lane.b32.xlu0 %v417, 111
      %v820 = vpop.permute.xlu0 %819
      %821 = vrot.lane.b32.xlu0 %v418, 111
      %v822 = vpop.permute.xlu0 %821
      %vm823 = vcmask 908288
      %v824 = vsel %vm823, %v812, %v814
      %v825 = vsel %vm823, %v814, %v816
      %v826 = vsel %vm823, %v818, %v820
      %v827 = vsel %vm823, %v820, %v822
      %832 = vrot.lane.b32.xlu0 %v469, 111
      %v833 = vpop.permute.xlu0 %832
      %834 = vrot.lane.b32.xlu0 %v470, 111
      %v835 = vpop.permute.xlu0 %834
      %836 = vrot.lane.b32.xlu0 %v471, 111
      %v837 = vpop.permute.xlu0 %836
      %838 = vrot.lane.b32.xlu0 %v473, 111
      %v839 = vpop.permute.xlu0 %838
      %840 = vrot.lane.b32.xlu0 %v474, 111
      %v841 = vpop.permute.xlu0 %840
      %842 = vrot.lane.b32.xlu0 %v475, 111
      %v843 = vpop.permute.xlu0 %842
      %v844 = vsel %vm823, %v833, %v835
      %v845 = vsel %vm823, %v835, %v837
      %v846 = vsel %vm823, %v839, %v841
      %v847 = vsel %vm823, %v841, %v843
      %v852 = vld [vmem:[%s1] sm:$0xff]
      %v853 = vld [vmem:[%s1 + $0x8] sm:$0xf]
      %v854 = vld [vmem:[%s1 + $0xc] sm:$0xff]
      %v855 = vld [vmem:[%s1 + $0x14] sm:$0xf]
      %v856 = vld [vmem:[%s2] sm:$0xff]
      %v857 = vld [vmem:[%s2 + $0x8] sm:$0xff]
      %859 = vset.pattern.permute.xlu0 0
      %860 = vperm.xlu0 %859, %v856
      %v861 = vpop.permute.xlu0 %860
      %864 = vset.pattern.permute.xlu0 0
      %865 = vperm.xlu0 %864, %v857
      %v866 = vpop.permute.xlu0 %865
      %v872 = vunpack.c.l.b16 %v852
      %v873 = vunpack.c.h.b16 %v852
      %v874 = vunpack.c.l.b16 %v853
      %v875 = vunpack.c.l.b16 %v854
      %v876 = vunpack.c.h.b16 %v854
      %v877 = vunpack.c.l.b16 %v855
      %v878 = vpack.c.b16 %v875, %v872
      %v879 = vpack.c.b16 %v876, %v873
      %v880 = vpack.c.b16 %v877, %v874
      %vm883 = vcmask 261120
      %v885 = vsel %vm883, %v880, 0
      %887 = vmatprep.subr.bf16.mxu0 %v496
      %888 = vmatpush1.bf16.msra.mxu0 %v495
      %889 = vmatprep.subr.bf16.mxu0 %v498
      %890 = vmatpush1.bf16.msra.mxu0 %v497
      %891 = vmatprep.subr.bf16.mxu0 %v549
      %892 = vmatpush1.bf16.msra.mxu0 %v548
      %893 = vmatprep.subr.bf16.mxu0 %v551
      %894 = vmatpush1.bf16.msra.mxu0 %v550
      %895 = vmatprep.subr.bf16.mxu0 %v602
      %896 = vmatpush1.bf16.msra.mxu0 %v601
      %897 = vmatprep.subr.bf16.mxu0 %v604
      %898 = vmatpush1.bf16.msra.mxu0 %v603
      %899 = vmatprep.subr.bf16.mxu0 %v649
      %900 = vmatpush1.bf16.msra.mxu0 %v648
      %901 = vmatprep.subr.bf16.mxu0 %v651
      %902 = vmatpush1.bf16.msra.mxu0 %v650
      %903 = vmatprep.subr.bf16.mxu0 %v333
      %904 = vmatpush1.bf16.msra.mxu0 %v332
      %905 = vmatprep.subr.bf16.mxu0 %v337
      %906 = vmatpush1.bf16.msra.mxu0 %v336
      %907 = vmatprep.subr.bf16.mxu0 %v692
      %908 = vmatpush1.bf16.msra.mxu0 %v691
      %909 = vmatprep.subr.bf16.mxu0 %v694
      %910 = vmatpush1.bf16.msra.mxu0 %v693
      %911 = vmatprep.subr.bf16.mxu0 %v737
      %912 = vmatpush1.bf16.msra.mxu0 %v736
      %913 = vmatprep.subr.bf16.mxu0 %v739
      %914 = vmatpush1.bf16.msra.mxu0 %v738
      %915 = vmatprep.subr.bf16.mxu0 %v782
      %916 = vmatpush1.bf16.msra.mxu0 %v781
      %917 = vmatprep.subr.bf16.mxu0 %v784
      %918 = vmatpush1.bf16.msra.mxu0 %v783
      %919 = vmatprep.mubr.bf16.mxu0 %v879
      %920 = vmatmul.mubr.bf16.gmra.mrb[0].mxu0 %v878
      %v921 = vpop.f32.mrb[0].mxu0
      %v922 = vadd.f32 %v861, %v921
      %v923 = vpop.f32.mrb[0].mxu0
      %v924 = vadd.f32 %v861, %v923
      %v925 = vpop.f32.mrb[0].mxu0
      %v926 = vadd.f32 %v866, %v925
      %v927 = vpop.f32.mrb[0].mxu0
      %v928 = vadd.f32 %v866, %v927
      %929 = vdwg.mxu0
      %930 = vmatprep.subr.bf16.mxu0 %v825
      %931 = vmatpush1.bf16.msra.mxu0 %v824
      %932 = vmatprep.subr.bf16.mxu0 %v827
      %933 = vmatpush1.bf16.msra.mxu0 %v826
      %934 = vmatprep.subr.bf16.mxu0 0
      %935 = vmatpush1.bf16.msra.mxu0 0
      %936 = vmatprep.subr.bf16.mxu0 0
      %937 = vmatpush1.bf16.msra.mxu0 0
      %938 = vmatprep.subr.bf16.mxu0 0
      %939 = vmatpush1.bf16.msra.mxu0 0
      %940 = vmatprep.subr.bf16.mxu0 0
      %941 = vmatpush1.bf16.msra.mxu0 0
      %942 = vmatprep.subr.bf16.mxu0 0
      %943 = vmatpush1.bf16.msra.mxu0 0
      %944 = vmatprep.subr.bf16.mxu0 0
      %945 = vmatpush1.bf16.msra.mxu0 0
      %946 = vmatprep.subr.bf16.mxu0 0
      %947 = vmatpush1.bf16.msra.mxu0 0
      %948 = vmatprep.subr.bf16.mxu0 0
      %949 = vmatpush1.bf16.msra.mxu0 0
      %950 = vmatprep.subr.bf16.mxu0 0
      %951 = vmatpush1.bf16.msra.mxu0 0
      %952 = vmatprep.subr.bf16.mxu0 0
      %953 = vmatpush1.bf16.msra.mxu0 0
      %954 = vmatprep.subr.bf16.mxu0 0
      %955 = vmatpush1.bf16.msra.mxu0 0
      %956 = vmatprep.subr.bf16.mxu0 0
      %957 = vmatpush1.bf16.msra.mxu0 0
      %958 = vmatprep.subr.bf16.mxu0 0
      %959 = vmatpush1.bf16.msra.mxu0 0
      %960 = vmatprep.subr.bf16.mxu0 0
      %961 = vmatpush1.bf16.msra.mxu0 0
      %962 = vmatprep.mubr.bf16.mxu0 0
      %963 = vmatmul.mubr.bf16.gmra.mrb[0].mxu0 %v885
      %v964 = vpop.f32.mrb[0].mxu0
      %v965 = vadd.f32 %v922, %v964
      %v966 = vpop.f32.mrb[0].mxu0
      %v967 = vadd.f32 %v924, %v966
      %v968 = vpop.f32.mrb[0].mxu0
      %v969 = vadd.f32 %v926, %v968
      %v970 = vpop.f32.mrb[0].mxu0
      %v971 = vadd.f32 %v928, %v970
      %972 = vdwg.mxu0
      %973 = vmatprep.subr.bf16.mxu0 %v522
      %974 = vmatpush1.bf16.msra.mxu0 %v521
      %975 = vmatprep.subr.bf16.mxu0 %v524
      %976 = vmatpush1.bf16.msra.mxu0 %v523
      %977 = vmatprep.subr.bf16.mxu0 %v575
      %978 = vmatpush1.bf16.msra.mxu0 %v574
      %979 = vmatprep.subr.bf16.mxu0 %v577
      %980 = vmatpush1.bf16.msra.mxu0 %v576
      %981 = vmatprep.subr.bf16.mxu0 %v628
      %982 = vmatpush1.bf16.msra.mxu0 %v627
      %983 = vmatprep.subr.bf16.mxu0 %v630
      %984 = vmatpush1.bf16.msra.mxu0 %v629
      %985 = vmatprep.subr.bf16.mxu0 %v669
      %986 = vmatpush1.bf16.msra.mxu0 %v668
      %987 = vmatprep.subr.bf16.mxu0 %v671
      %988 = vmatpush1.bf16.msra.mxu0 %v670
      %989 = vmatprep.subr.bf16.mxu0 %v454
      %990 = vmatpush1.bf16.msra.mxu0 %v453
      %991 = vmatprep.subr.bf16.mxu0 %v458
      %992 = vmatpush1.bf16.msra.mxu0 %v457
      %993 = vmatprep.subr.bf16.mxu0 %v714
      %994 = vmatpush1.bf16.msra.mxu0 %v713
      %995 = vmatprep.subr.bf16.mxu0 %v716
      %996 = vmatpush1.bf16.msra.mxu0 %v715
      %997 = vmatprep.subr.bf16.mxu0 %v759
      %998 = vmatpush1.bf16.msra.mxu0 %v758
      %999 = vmatprep.subr.bf16.mxu0 %v761
      %1000 = vmatpush1.bf16.msra.mxu0 %v760
      %1001 = vmatprep.subr.bf16.mxu0 %v804
      %1002 = vmatpush1.bf16.msra.mxu0 %v803
      %1003 = vmatprep.subr.bf16.mxu0 %v806
      %1004 = vmatpush1.bf16.msra.mxu0 %v805
      %1005 = vmatprep.mubr.bf16.mxu0 %v879
      %1006 = vmatmul.mubr.bf16.gmra.mrb[0].mxu0 %v878
      %v1007 = vpop.f32.mrb[0].mxu0
      %v1008 = vadd.f32 %v861, %v1007
      %v1009 = vpop.f32.mrb[0].mxu0
      %v1010 = vadd.f32 %v861, %v1009
      %v1011 = vpop.f32.mrb[0].mxu0
      %v1012 = vadd.f32 %v866, %v1011
      %v1013 = vpop.f32.mrb[0].mxu0
      %v1014 = vadd.f32 %v866, %v1013
      %1015 = vdwg.mxu0
      %1016 = vmatprep.subr.bf16.mxu0 %v845
      %1017 = vmatpush1.bf16.msra.mxu0 %v844
      %1018 = vmatprep.subr.bf16.mxu0 %v847
      %1019 = vmatpush1.bf16.msra.mxu0 %v846
      %1020 = vmatprep.subr.bf16.mxu0 0
      %1021 = vmatpush1.bf16.msra.mxu0 0
      %1022 = vmatprep.subr.bf16.mxu0 0
      %1023 = vmatpush1.bf16.msra.mxu0 0
      %1024 = vmatprep.subr.bf16.mxu0 0
      %1025 = vmatpush1.bf16.msra.mxu0 0
      %1026 = vmatprep.subr.bf16.mxu0 0
      %1027 = vmatpush1.bf16.msra.mxu0 0
      %1028 = vmatprep.subr.bf16.mxu0 0
      %1029 = vmatpush1.bf16.msra.mxu0 0
      %1030 = vmatprep.subr.bf16.mxu0 0
      %1031 = vmatpush1.bf16.msra.mxu0 0
      %1032 = vmatprep.subr.bf16.mxu0 0
      %1033 = vmatpush1.bf16.msra.mxu0 0
      %1034 = vmatprep.subr.bf16.mxu0 0
      %1035 = vmatpush1.bf16.msra.mxu0 0
      %1036 = vmatprep.subr.bf16.mxu0 0
      %1037 = vmatpush1.bf16.msra.mxu0 0
      %1038 = vmatprep.subr.bf16.mxu0 0
      %1039 = vmatpush1.bf16.msra.mxu0 0
      %1040 = vmatprep.subr.bf16.mxu0 0
      %1041 = vmatpush1.bf16.msra.mxu0 0
      %1042 = vmatprep.subr.bf16.mxu0 0
      %1043 = vmatpush1.bf16.msra.mxu0 0
      %1044 = vmatprep.subr.bf16.mxu0 0
      %1045 = vmatpush1.bf16.msra.mxu0 0
      %1046 = vmatprep.subr.bf16.mxu0 0
      %1047 = vmatpush1.bf16.msra.mxu0 0
      %1048 = vmatprep.mubr.bf16.mxu0 0
      %1049 = vmatmul.mubr.bf16.gmra.mrb[0].mxu0 %v885
      %v1050 = vpop.f32.mrb[0].mxu0
      %v1051 = vadd.f32 %v1008, %v1050
      %v1052 = vpop.f32.mrb[0].mxu0
      %v1053 = vadd.f32 %v1010, %v1052
      %v1054 = vpop.f32.mrb[0].mxu0
      %v1055 = vadd.f32 %v1012, %v1054
      %v1056 = vpop.f32.mrb[0].mxu0
      %v1057 = vadd.f32 %v1014, %v1056
      %1058 = vdwg.mxu0
      %v1059 = vmax.f32 %v965, 0.0
      %v1060 = vmax.f32 %v967, 0.0
      %v1061 = vmax.f32 %v1051, 0.0
      %v1062 = vmax.f32 %v1053, 0.0
      %v1063 = vmax.f32 %v969, 0.0
      %v1064 = vmax.f32 %v971, 0.0
      %v1065 = vmax.f32 %v1055, 0.0
      %v1066 = vmax.f32 %v1057, 0.0
      %v1067 = vld [vmem:[%s3] sm:$0xf]
      %v1068 = vld [vmem:[%s3 + $0x4] sm:$0xf]
      %v1069 = vld [vmem:[%s3 + $0x8] sm:$0xf]
      %v1070 = vld [vmem:[%s3 + $0xc] sm:$0xf]
      %v1071 = vpack.c.bf16 %v1063, %v1059
      %v1072 = vpack.c.bf16 %v1064, %v1060
      %v1073 = vpack.c.bf16 %v1065, %v1061
      %v1074 = vpack.c.bf16 %v1066, %v1062
      %v1075 = vld [vmem:[%s4] sm:$0xff]
      %v1076 = vld [vmem:[%s4 + $0x8] sm:$0xff]
      %v1077 = vld [vmem:[%s4 + $0x10] sm:$0xff]
      %v1078 = vld [vmem:[%s4 + $0x18] sm:$0xff]
      %1080 = vset.pattern.permute.xlu0 0
      %1081 = vperm.xlu0 %1080, %v1075
      %v1082 = vpop.permute.xlu0 %1081
      %1085 = vset.pattern.permute.xlu0 0
      %1086 = vperm.xlu0 %1085, %v1076
      %v1087 = vpop.permute.xlu0 %1086
      %1090 = vset.pattern.permute.xlu0 0
      %1091 = vperm.xlu0 %1090, %v1077
      %v1092 = vpop.permute.xlu0 %1091
      %1095 = vset.pattern.permute.xlu0 0
      %1096 = vperm.xlu0 %1095, %v1078
      %v1097 = vpop.permute.xlu0 %1096
      %v1103 = vunpack.c.l.b16 %v1067
      %v1104 = vunpack.c.l.b16 %v1068
      %v1105 = vunpack.c.l.b16 %v1069
      %v1106 = vunpack.c.l.b16 %v1070
      %v1107 = vpack.c.b16 %v1104, %v1103
      %v1108 = vpack.c.b16 %v1106, %v1105
      %vm1109 = vcmask 130048
      %v1111 = vsel %vm1109, %v1107, 0
      %v1114 = vsel %vm1109, %v1108, 0
      %1116 = vmatprep.subr.bf16.mxu0 %v1072
      %1117 = vmatpush1.bf16.msra.mxu0 %v1071
      %1118 = vmatprep.subr.bf16.mxu0 0
      %1119 = vmatpush1.bf16.msra.mxu0 0
      %1120 = vmatprep.subr.bf16.mxu0 0
      %1121 = vmatpush1.bf16.msra.mxu0 0
      %1122 = vmatprep.subr.bf16.mxu0 0
      %1123 = vmatpush1.bf16.msra.mxu0 0
      %1124 = vmatprep.subr.bf16.mxu0 0
      %1125 = vmatpush1.bf16.msra.mxu0 0
      %1126 = vmatprep.subr.bf16.mxu0 0
      %1127 = vmatpush1.bf16.msra.mxu0 0
      %1128 = vmatprep.subr.bf16.mxu0 0
      %1129 = vmatpush1.bf16.msra.mxu0 0
      %1130 = vmatprep.subr.bf16.mxu0 0
      %1131 = vmatpush1.bf16.msra.mxu0 0
      %1132 = vmatprep.subr.bf16.mxu0 0
      %1133 = vmatpush1.bf16.msra.mxu0 0
      %1134 = vmatprep.subr.bf16.mxu0 0
      %1135 = vmatpush1.bf16.msra.mxu0 0
      %1136 = vmatprep.subr.bf16.mxu0 0
      %1137 = vmatpush1.bf16.msra.mxu0 0
      %1138 = vmatprep.subr.bf16.mxu0 0
      %1139 = vmatpush1.bf16.msra.mxu0 0
      %1140 = vmatprep.subr.bf16.mxu0 0
      %1141 = vmatpush1.bf16.msra.mxu0 0
      %1142 = vmatprep.subr.bf16.mxu0 0
      %1143 = vmatpush1.bf16.msra.mxu0 0
      %1144 = vmatprep.subr.bf16.mxu0 0
      %1145 = vmatpush1.bf16.msra.mxu0 0
      %1146 = vmatprep.subr.bf16.mxu0 0
      %1147 = vmatpush1.bf16.msra.mxu0 0
      %1148 = vmatprep.mubr.bf16.mxu0 0
      %1149 = vmatmul.mubr.bf16.gmra.mrb[0].mxu0 %v1111
      %v1150 = vpop.f32.mrb[0].mxu0
      %v1151 = vadd.f32 %v1082, %v1150
      %v1152 = vpop.f32.mrb[0].mxu0
      %v1153 = vadd.f32 %v1082, %v1152
      %v1154 = vpop.f32.mrb[0].mxu0
      %v1155 = vadd.f32 %v1087, %v1154
      %v1156 = vpop.f32.mrb[0].mxu0
      %v1157 = vadd.f32 %v1087, %v1156
      %1158 = vmatprep.mubr.bf16.mxu0 0
      %1159 = vmatmul.mubr.bf16.gmra.mrb[0].mxu0 %v1114
      %v1160 = vpop.f32.mrb[0].mxu0
      %v1161 = vadd.f32 %v1092, %v1160
      %v1162 = vpop.f32.mrb[0].mxu0
      %v1163 = vadd.f32 %v1092, %v1162
      %v1164 = vpop.f32.mrb[0].mxu0
      %v1165 = vadd.f32 %v1097, %v1164
      %v1166 = vpop.f32.mrb[0].mxu0
      %v1167 = vadd.f32 %v1097, %v1166
      %1168 = vdwg.mxu0
      %1169 = vmatprep.subr.bf16.mxu0 %v1074
      %1170 = vmatpush1.bf16.msra.mxu0 %v1073
      %1171 = vmatprep.subr.bf16.mxu0 0
      %1172 = vmatpush1.bf16.msra.mxu0 0
      %1173 = vmatprep.subr.bf16.mxu0 0
      %1174 = vmatpush1.bf16.msra.mxu0 0
      %1175 = vmatprep.subr.bf16.mxu0 0
      %1176 = vmatpush1.bf16.msra.mxu0 0
      %1177 = vmatprep.subr.bf16.mxu0 0
      %1178 = vmatpush1.bf16.msra.mxu0 0
      %1179 = vmatprep.subr.bf16.mxu0 0
      %1180 = vmatpush1.bf16.msra.mxu0 0
      %1181 = vmatprep.subr.bf16.mxu0 0
      %1182 = vmatpush1.bf16.msra.mxu0 0
      %1183 = vmatprep.subr.bf16.mxu0 0
      %1184 = vmatpush1.bf16.msra.mxu0 0
      %1185 = vmatprep.subr.bf16.mxu0 0
      %1186 = vmatpush1.bf16.msra.mxu0 0
      %1187 = vmatprep.subr.bf16.mxu0 0
      %1188 = vmatpush1.bf16.msra.mxu0 0
      %1189 = vmatprep.subr.bf16.mxu0 0
      %1190 = vmatpush1.bf16.msra.mxu0 0
      %1191 = vmatprep.subr.bf16.mxu0 0
      %1192 = vmatpush1.bf16.msra.mxu0 0
      %1193 = vmatprep.subr.bf16.mxu0 0
      %1194 = vmatpush1.bf16.msra.mxu0 0
      %1195 = vmatprep.subr.bf16.mxu0 0
      %1196 = vmatpush1.bf16.msra.mxu0 0
      %1197 = vmatprep.subr.bf16.mxu0 0
      %1198 = vmatpush1.bf16.msra.mxu0 0
      %1199 = vmatprep.subr.bf16.mxu0 0
      %1200 = vmatpush1.bf16.msra.mxu0 0
      %1201 = vmatprep.mubr.bf16.mxu0 0
      %1202 = vmatmul.mubr.bf16.gmra.mrb[0].mxu0 %v1111
      %v1203 = vpop.f32.mrb[0].mxu0
      %v1204 = vadd.f32 %v1082, %v1203
      %v1205 = vpop.f32.mrb[0].mxu0
      %v1206 = vadd.f32 %v1082, %v1205
      %v1207 = vpop.f32.mrb[0].mxu0
      %v1208 = vadd.f32 %v1087, %v1207
      %v1209 = vpop.f32.mrb[0].mxu0
      %v1210 = vadd.f32 %v1087, %v1209
      %1211 = vmatprep.mubr.bf16.mxu0 0
      %1212 = vmatmul.mubr.bf16.gmra.mrb[0].mxu0 %v1114
      %v1213 = vpop.f32.mrb[0].mxu0
      %v1214 = vadd.f32 %v1092, %v1213
      %v1215 = vpop.f32.mrb[0].mxu0
      %v1216 = vadd.f32 %v1092, %v1215
      %v1217 = vpop.f32.mrb[0].mxu0
      %v1218 = vadd.f32 %v1097, %v1217
      %v1219 = vpop.f32.mrb[0].mxu0
      %v1220 = vadd.f32 %v1097, %v1219
      %1221 = vdwg.mxu0
      %v1222 = vadd.f32 %v1151, %v300
      %v1223 = vadd.f32 %v1153, %v301
      %v1224 = vadd.f32 %v1155, %v304
      %v1225 = vadd.f32 %v1157, %v305
      %v1226 = vadd.f32 %v1161, %v308
      %v1227 = vadd.f32 %v1163, %v309
      %v1228 = vadd.f32 %v1165, %v312
      %v1229 = vadd.f32 %v1167, %v313
      %1230 = vst [vmem:[%s231] sm:$0xff] %v1222
      %1231 = vst [vmem:[%s231 + $0x8] sm:$0xff] %v1223
      %1232 = vst [vmem:[%s231 + $0x10] sm:$0xff] %v1224
      %1233 = vst [vmem:[%s231 + $0x18] sm:$0xff] %v1225
      %1234 = vst [vmem:[%s231 + $0x20] sm:$0xff] %v1226
      %1235 = vst [vmem:[%s231 + $0x28] sm:$0xff] %v1227
      %1236 = vst [vmem:[%s231 + $0x30] sm:$0xff] %v1228
      %1237 = vst [vmem:[%s231 + $0x38] sm:$0xff] %v1229
      %v1238 = vld [vmem:[%s419 + $0x8] sm:$0xff]
      %v1239 = vld [vmem:[%s419 + $0x10] sm:$0xff]
      %v1240 = vld [vmem:[%s419 + $0x28] sm:$0xff]
      %v1241 = vld [vmem:[%s419 + $0x30] sm:$0xff]
      %v1242 = vld [vmem:[%s419 + $0x48] sm:$0xff]
      %v1243 = vld [vmem:[%s419 + $0x50] sm:$0xff]
      %v1244 = vld [vmem:[%s419 + $0x68] sm:$0xff]
      %v1245 = vld [vmem:[%s419 + $0x70] sm:$0xff]
      %v1246 = vadd.f32 %v1204, %v1238
      %v1247 = vadd.f32 %v1206, %v1239
      %v1248 = vadd.f32 %v1208, %v1240
      %v1249 = vadd.f32 %v1210, %v1241
      %v1250 = vadd.f32 %v1214, %v1242
      %v1251 = vadd.f32 %v1216, %v1243
      %v1252 = vadd.f32 %v1218, %v1244
      %v1253 = vadd.f32 %v1220, %v1245
      %s1254 = scalar_lea.vmem %s231, 64
      %1255 = vst [vmem:[%s1254] sm:$0xff] %v1246
      %1256 = vst [vmem:[%s1254 + $0x8] sm:$0xff] %v1247
      %1257 = vst [vmem:[%s1254 + $0x10] sm:$0xff] %v1248
      %1258 = vst [vmem:[%s1254 + $0x18] sm:$0xff] %v1249
      %1259 = vst [vmem:[%s1254 + $0x20] sm:$0xff] %v1250
      %1260 = vst [vmem:[%s1254 + $0x28] sm:$0xff] %v1251
      %1261 = vst [vmem:[%s1254 + $0x30] sm:$0xff] %v1252
      %1262 = vst [vmem:[%s1254 + $0x38] sm:$0xff] %v1253
      %s1263 = smul.u32 2, %s16
      %p1264 = scmp.lt.s32.totalorder %s1263, 3
      %s1265 = scalar_select %p1264, %s1263, 3
      %s1266 = smul.addr %s1265, 8
      %s1267 = smul.addr %s1266, 8
      %s1268 = scalar_lea.vmem %s5, %s1267
      // Predicated region
      $region41: #{resblock_forward.1} parent=39 // pred_check
        %p1269 = pneg %p144
      $region42: #{resblock_forward.1} parent=39 // pred_check_branch
        %1271 = sbr.rel (%p1269) target = $region44
      $region43: #{resblock_forward.1} parent=39 // pred_region
        %s1272 = smul.u32 2, %s16
      $region44: #{resblock_forward.1} parent=39 // pred_fallthru
        _
    $region40: #{resblock_forward.1} parent=5 // pred_fallthru
      _
    %p1273 = scmp.le.s32.totalorder 2, %s11
    // Predicated region
    $region45: #{resblock_forward.1} parent=5 // pred_check
      %p1274 = pneg %p1273
    $region46: #{resblock_forward.1} parent=5 // pred_check_branch
      %1276 = sbr.rel (%p1274) target = $region48
    $region47: #{resblock_forward.1} parent=5 // pred_region
      %s1277 = ssub.s32 %s11, 2
      // Predicated region
      $region49: #{resblock_forward.1} parent=47 // pred_check
        %p1278 = pneg %p150
      $region50: #{resblock_forward.1} parent=47 // pred_check_branch
        %1280 = sbr.rel (%p1278) target = $region52
      $region51: #{resblock_forward.1} parent=47 // pred_region
        %s1281 = smul.u32 2, %s17
        %p1282 = scmp.lt.s32.totalorder %s1281, 3
        %s1283 = scalar_select %p1282, %s1281, 3
        %s1284 = smul.addr %s1283, 8
        %s1285 = smul.addr %s1284, 8
        %s1286 = scalar_lea.vmem %s5, %s1285
      $region52: #{resblock_forward.1} parent=47 // pred_fallthru
        _
    $region48: #{resblock_forward.1} parent=5 // pred_fallthru
      _
  $region6: #{resblock_forward.1} parent=0 // loop_footer
    %s15 = sadd.s32 1, %s11
  $region7: #{resblock_forward.1} parent=0 // loop_footer_branch
    %10 = sbr.rel target = $region3
  $region8: #{resblock_forward.1} parent=0 // loop_exit
    _

</llo_original>
